<compile_context>
chip_gen: v7x
topology: tpu7x:2x2x1
jax: 0.10.0
libtpu: 0.0.40
codegen_flags: <defaults>
</compile_context>

<pallas_src>
import functools

import jax
import jax.numpy as jnp
from jax.experimental import pallas as pl
from jax.experimental.pallas import tpu as pltpu


def _round_up(n, m):
    return ((n + m - 1) // m) * m


def _choose_batch_tile(B, batch_tile):
    """Pick a batch tile: multiple of 16 rows, >=2 grid steps when the batch is
    big enough (v7x megacore), full-array block for tiny batches."""
    if B <= batch_tile:
        half = _round_up(-(-B // 2), 16)
        if half < B:
            return half          # 2 grid steps; last one masked if ragged
        return B                 # tiny batch: single full-array block
    return _round_up(batch_tile, 16)


def _fnet_kernel(x_ref, w1_ref, b1_ref, w2_ref, b2_ref, w3_ref, b3_ref, o_ref):
    # In-kernel cast of the activations to bf16 (cheap VPU work, hidden under
    # the input DMA / MXU); f32 accumulation via preferred_element_type.
    x = x_ref[...].astype(jnp.bfloat16)
    # Layer 1: Linear(out_dim -> f_dim) + ReLU
    h = jnp.dot(x, w1_ref[...], preferred_element_type=jnp.float32)
    h = jnp.maximum(h + b1_ref[...], 0.0).astype(jnp.bfloat16)
    # Layer 2: Linear(f_dim -> f_dim) + ReLU
    h = jnp.dot(h, w2_ref[...], preferred_element_type=jnp.float32)
    h = jnp.maximum(h + b2_ref[...], 0.0).astype(jnp.bfloat16)
    # Layer 3: Linear(f_dim -> out_dim), compact store
    y = jnp.dot(h, w3_ref[...], preferred_element_type=jnp.float32)
    o_ref[...] = (y + b3_ref[...]).astype(o_ref.dtype)


@functools.partial(jax.jit, static_argnames=("batch_tile",))
def fnet_forward(x, w1, b1, w2, b2, w3, b3, *, batch_tile=4096):
    """x: (B, out_dim).  w1: (out_dim, f_dim), w2: (f_dim, f_dim), w3: (f_dim, out_dim).
    Biases are kept 2-D (1, features) for TPU-friendly broadcasting."""
    B, in_dim = x.shape
    f_dim = w1.shape[1]
    out_dim = w3.shape[1]
    out_dtype = x.dtype

    bt = _choose_batch_tile(B, batch_tile)
    grid = (pl.cdiv(B, bt),)

    # Weights/biases are ~40 KiB total: one-time wrapper cast is negligible and
    # halves their per-step DMA bytes. Activations are NOT touched in the wrapper.
    bf16 = jnp.bfloat16
    w1_bf, w2_bf, w3_bf = w1.astype(bf16), w2.astype(bf16), w3.astype(bf16)
    b1_f = b1.astype(jnp.float32)
    b2_f = b2.astype(jnp.float32)
    b3_f = b3.astype(jnp.float32)

    # Memory-bound cost hint for XLA's scheduler.
    n_weight = in_dim * f_dim + f_dim * f_dim + f_dim * out_dim
    flops = 2 * B * n_weight
    bytes_accessed = (
        B * in_dim * x.dtype.itemsize          # x read
        + B * out_dim * x.dtype.itemsize       # y write
        + 2 * n_weight                         # bf16 weights
        + 4 * (2 * f_dim + out_dim)            # f32 biases
    )

    # Tile only over the batch axis; weights/biases are VMEM-resident
    # (constant index maps) across all grid steps.
    in_specs = [
        pl.BlockSpec((bt, in_dim), lambda i: (i, 0)),       # x tile
        pl.BlockSpec((in_dim, f_dim), lambda i: (0, 0)),    # w1
        pl.BlockSpec((1, f_dim), lambda i: (0, 0)),         # b1
        pl.BlockSpec((f_dim, f_dim), lambda i: (0, 0)),     # w2
        pl.BlockSpec((1, f_dim), lambda i: (0, 0)),         # b2
        pl.BlockSpec((f_dim, out_dim), lambda i: (0, 0)),   # w3
        pl.BlockSpec((1, out_dim), lambda i: (0, 0)),       # b3
    ]
    out_specs = pl.BlockSpec((bt, out_dim), lambda i: (i, 0))

    return pl.pallas_call(
        _fnet_kernel,
        out_shape=jax.ShapeDtypeStruct((B, out_dim), out_dtype),
        grid_spec=pltpu.PrefetchScalarGridSpec(
            num_scalar_prefetch=0,
            grid=grid,
            in_specs=in_specs,
            out_specs=out_specs,
        ),
        compiler_params=pltpu.CompilerParams(
            dimension_semantics=("parallel",),     # megacore sharding on v7x
            vmem_limit_bytes=32 * 1024 * 1024,     # explicit, portable to v7x
        ),
        cost_estimate=pl.CostEstimate(
            flops=flops, transcendentals=0, bytes_accessed=bytes_accessed),
    )(x, w1_bf, b1_f, w2_bf, b2_f, w3_bf, b3_f)


def init_fnet_params(key, out_dim, f_dim, dtype=jnp.float32):
    """Deterministic init mimicking PyTorch's default U(-1/sqrt(fan_in), 1/sqrt(fan_in)).
    Weights are stored as (in_features, out_features)."""
    ks = jax.random.split(key, 6)

    def uniform(k, shape, fan_in):
        bound = 1.0 / jnp.sqrt(jnp.array(fan_in, dtype=jnp.float32))
        return jax.random.uniform(k, shape, dtype=dtype, minval=-bound, maxval=bound)

    w1 = uniform(ks[0], (out_dim, f_dim), out_dim)
    b1 = uniform(ks[1], (1, f_dim), out_dim)
    w2 = uniform(ks[2], (f_dim, f_dim), f_dim)
    b2 = uniform(ks[3], (1, f_dim), f_dim)
    w3 = uniform(ks[4], (f_dim, out_dim), f_dim)
    b3 = uniform(ks[5], (1, out_dim), f_dim)
    return w1, b1, w2, b2, w3, b3


def fnet_reference(x, w1, b1, w2, b2, w3, b3):
    """Reference that mirrors the kernel's bf16-operand / f32-accumulate numerics."""
    bf = jnp.bfloat16
    h = jnp.dot(x.astype(bf), w1.astype(bf), preferred_element_type=jnp.float32)
    h = jnp.maximum(h + b1, 0.0).astype(bf)
    h = jnp.dot(h, w2.astype(bf), preferred_element_type=jnp.float32)
    h = jnp.maximum(h + b2, 0.0).astype(bf)
    y = jnp.dot(h, w3.astype(bf), preferred_element_type=jnp.float32) + b3
    return y


if __name__ == "__main__":
    # Small shapes consistent with the module: namedict.out_dim=32, namedict.f_dim=64.
    # batch=300 exercises the two-step grid (v7x parallel axis) and the masked
    # ragged edge block (160-row tiles covering 300 rows).
    batch, out_dim, f_dim = 300, 32, 64

    key = jax.random.PRNGKey(0)
    k_x, k_p = jax.random.split(key)
    x = jax.random.normal(k_x, (batch, out_dim), dtype=jnp.float32)
    params = init_fnet_params(k_p, out_dim, f_dim)

    y = fnet_forward(x, *params)
    y = jax.block_until_ready(y)

    y_ref = fnet_reference(x, *params)
    assert y.shape == (batch, out_dim)
    err = float(jnp.max(jnp.abs(y - y_ref.astype(y.dtype))))
    assert jnp.allclose(y, y_ref.astype(y.dtype), atol=2e-2, rtol=2e-2), err

    print("KERNEL_OK")
</pallas_src>

<mosaic_0001>
module attributes {stable_mosaic.version = 11 : i64} {
  func.func @_fnet_kernel(%arg0: i32, %arg1: memref<160x32xf32, #tpu.memory_space<vmem>>, %arg2: memref<32x64xbf16, #tpu.memory_space<vmem>>, %arg3: memref<1x64xf32, #tpu.memory_space<vmem>>, %arg4: memref<64x64xbf16, #tpu.memory_space<vmem>>, %arg5: memref<1x64xf32, #tpu.memory_space<vmem>>, %arg6: memref<64x32xbf16, #tpu.memory_space<vmem>>, %arg7: memref<1x32xf32, #tpu.memory_space<vmem>>, %arg8: memref<160x32xf32, #tpu.memory_space<vmem>>) attributes {dimension_semantics = [#tpu.dimension_semantics<parallel>], iteration_bounds = array<i64: 2>, scalar_prefetch = 0 : i64, scratch_operands = 0 : i64, tpu.core_type = #tpu.core_type<tc>, window_params = [{transform_indices = @transform_0, window_bounds = array<i64: 160, 32>}, {pipeline_mode = #tpu.pipeline_mode<synchronous>, transform_indices = @transform_1, window_bounds = array<i64: 32, 64>}, {pipeline_mode = #tpu.pipeline_mode<synchronous>, transform_indices = @transform_2, window_bounds = array<i64: 1, 64>}, {pipeline_mode = #tpu.pipeline_mode<synchronous>, transform_indices = @transform_3, window_bounds = array<i64: 64, 64>}, {pipeline_mode = #tpu.pipeline_mode<synchronous>, transform_indices = @transform_4, window_bounds = array<i64: 1, 64>}, {pipeline_mode = #tpu.pipeline_mode<synchronous>, transform_indices = @transform_5, window_bounds = array<i64: 64, 32>}, {pipeline_mode = #tpu.pipeline_mode<synchronous>, transform_indices = @transform_6, window_bounds = array<i64: 1, 32>}, {transform_indices = @transform_7, window_bounds = array<i64: 160, 32>}]} {
    %c0 = arith.constant 0 : index
    %c0_0 = arith.constant 0 : index
    %0 = vector.load %arg1[%c0, %c0_0] : memref<160x32xf32, #tpu.memory_space<vmem>>, vector<160x32xf32>
    %1 = arith.truncf %0 : vector<160x32xf32> to vector<160x32xbf16>
    %c0_1 = arith.constant 0 : index
    %c0_2 = arith.constant 0 : index
    %2 = vector.load %arg2[%c0_1, %c0_2] : memref<32x64xbf16, #tpu.memory_space<vmem>>, vector<32x64xbf16>
    %cst = arith.constant dense<0.000000e+00> : vector<160x64xf32>
    %3 = tpu.matmul %1, %2, %cst {dimension_numbers = #tpu.dot_dimension_numbers<[1], [0], [0], [1], [0, 0, 1, 1], [], []>} : vector<160x32xbf16>, vector<32x64xbf16>, vector<160x64xf32> -> vector<160x64xf32>
    %c0_3 = arith.constant 0 : index
    %c0_4 = arith.constant 0 : index
    %4 = vector.load %arg3[%c0_3, %c0_4] : memref<1x64xf32, #tpu.memory_space<vmem>>, vector<1x64xf32>
    %5 = vector.broadcast %4 : vector<1x64xf32> to vector<160x64xf32>
    %6 = arith.addf %3, %5 : vector<160x64xf32>
    %cst_5 = arith.constant 0.000000e+00 : f32
    %7 = vector.broadcast %cst_5 : f32 to vector<160x64xf32>
    %8 = arith.maximumf %6, %7 : vector<160x64xf32>
    %9 = arith.truncf %8 : vector<160x64xf32> to vector<160x64xbf16>
    %c0_6 = arith.constant 0 : index
    %c0_7 = arith.constant 0 : index
    %10 = vector.load %arg4[%c0_6, %c0_7] : memref<64x64xbf16, #tpu.memory_space<vmem>>, vector<64x64xbf16>
    %cst_8 = arith.constant dense<0.000000e+00> : vector<160x64xf32>
    %11 = tpu.matmul %9, %10, %cst_8 {dimension_numbers = #tpu.dot_dimension_numbers<[1], [0], [0], [1], [0, 0, 1, 1], [], []>} : vector<160x64xbf16>, vector<64x64xbf16>, vector<160x64xf32> -> vector<160x64xf32>
    %c0_9 = arith.constant 0 : index
    %c0_10 = arith.constant 0 : index
    %12 = vector.load %arg5[%c0_9, %c0_10] : memref<1x64xf32, #tpu.memory_space<vmem>>, vector<1x64xf32>
    %13 = vector.broadcast %12 : vector<1x64xf32> to vector<160x64xf32>
    %14 = arith.addf %11, %13 : vector<160x64xf32>
    %cst_11 = arith.constant 0.000000e+00 : f32
    %15 = vector.broadcast %cst_11 : f32 to vector<160x64xf32>
    %16 = arith.maximumf %14, %15 : vector<160x64xf32>
    %17 = arith.truncf %16 : vector<160x64xf32> to vector<160x64xbf16>
    %c0_12 = arith.constant 0 : index
    %c0_13 = arith.constant 0 : index
    %18 = vector.load %arg6[%c0_12, %c0_13] : memref<64x32xbf16, #tpu.memory_space<vmem>>, vector<64x32xbf16>
    %cst_14 = arith.constant dense<0.000000e+00> : vector<160x32xf32>
    %19 = tpu.matmul %17, %18, %cst_14 {dimension_numbers = #tpu.dot_dimension_numbers<[1], [0], [0], [1], [0, 0, 1, 1], [], []>} : vector<160x64xbf16>, vector<64x32xbf16>, vector<160x32xf32> -> vector<160x32xf32>
    %c0_15 = arith.constant 0 : index
    %c0_16 = arith.constant 0 : index
    %20 = vector.load %arg7[%c0_15, %c0_16] : memref<1x32xf32, #tpu.memory_space<vmem>>, vector<1x32xf32>
    %21 = vector.broadcast %20 : vector<1x32xf32> to vector<160x32xf32>
    %22 = arith.addf %19, %21 : vector<160x32xf32>
    %c0_17 = arith.constant 0 : index
    %c0_18 = arith.constant 0 : index
    %23 = vector.load %arg8[%c0_17, %c0_18] : memref<160x32xf32, #tpu.memory_space<vmem>>, vector<160x32xf32>
    tpu.vector_store %arg8[%c0_17, %c0_18], %22 {strides = array<i32>} : memref<160x32xf32, #tpu.memory_space<vmem>>, vector<160x32xf32>,
    return
  }
  func.func @transform_0(%arg0: i32) -> (i32, i32) {
    %c0_i32 = arith.constant 0 : i32
    %c0_i32_0 = arith.constant 0 : i32
    return %arg0, %c0_i32 : i32, i32
  }
  func.func @transform_1(%arg0: i32) -> (i32, i32) {
    %c0_i32 = arith.constant 0 : i32
    %c0_i32_0 = arith.constant 0 : i32
    %c0_i32_1 = arith.constant 0 : i32
    return %c0_i32, %c0_i32_0 : i32, i32
  }
  func.func @transform_2(%arg0: i32) -> (i32, i32) {
    %c0_i32 = arith.constant 0 : i32
    %c0_i32_0 = arith.constant 0 : i32
    %c0_i32_1 = arith.constant 0 : i32
    return %c0_i32, %c0_i32_0 : i32, i32
  }
  func.func @transform_3(%arg0: i32) -> (i32, i32) {
    %c0_i32 = arith.constant 0 : i32
    %c0_i32_0 = arith.constant 0 : i32
    %c0_i32_1 = arith.constant 0 : i32
    return %c0_i32, %c0_i32_0 : i32, i32
  }
  func.func @transform_4(%arg0: i32) -> (i32, i32) {
    %c0_i32 = arith.constant 0 : i32
    %c0_i32_0 = arith.constant 0 : i32
    %c0_i32_1 = arith.constant 0 : i32
    return %c0_i32, %c0_i32_0 : i32, i32
  }
  func.func @transform_5(%arg0: i32) -> (i32, i32) {
    %c0_i32 = arith.constant 0 : i32
    %c0_i32_0 = arith.constant 0 : i32
    %c0_i32_1 = arith.constant 0 : i32
    return %c0_i32, %c0_i32_0 : i32, i32
  }
  func.func @transform_6(%arg0: i32) -> (i32, i32) {
    %c0_i32 = arith.constant 0 : i32
    %c0_i32_0 = arith.constant 0 : i32
    %c0_i32_1 = arith.constant 0 : i32
    return %c0_i32, %c0_i32_0 : i32, i32
  }
  func.func @transform_7(%arg0: i32) -> (i32, i32) {
    %c0_i32 = arith.constant 0 : i32
    %c0_i32_0 = arith.constant 0 : i32
    return %arg0, %c0_i32 : i32, i32
  }
}

</mosaic_0001>

<llo_original>
// kernel: fnet_forward.1
$region0: #{fnet_forward.1}
  #allocation0 [shape = 'u32[]', space=smem, size = 0x4, offset = 0x4, fixed_abs, tag = 'smem constant byte address 0x4 - core index']
  #allocation1 [shape = 'u32[144,128]{1,0:T(1,128)}', space=vmem, size = 0x12000, scoped, tag = 'internal scratch']
  %s0 = inlined_call_operand.vmem [shape: f32[300,32], index: 0, kind: input, shape index: {}]
  %s1 = inlined_call_operand.vmem [shape: bf16[32,64], index: 1, kind: input, shape index: {}]
  %s2 = inlined_call_operand.vmem [shape: f32[1,64], index: 2, kind: input, shape index: {}]
  %s3 = inlined_call_operand.vmem [shape: bf16[64,64], index: 3, kind: input, shape index: {}]
  %s4 = inlined_call_operand.vmem [shape: f32[1,64], index: 4, kind: input, shape index: {}]
  %s5 = inlined_call_operand.vmem [shape: bf16[64,32], index: 5, kind: input, shape index: {}]
  %s6 = inlined_call_operand.vmem [shape: f32[1,32], index: 6, kind: input, shape index: {}]
  %s7 = inlined_call_operand.vmem [shape: f32[300,32], index: 7, kind: output, shape index: {}]
  %s8 = sld [smem:[#allocation0]]
  $region109: #{fnet_forward.1} parent=0
    _
  %s10 = ssub.s32 1, %s8
  %s11 = scalar_select 0, %s10, %s8
  $region1: #{fnet_forward.1} parent=0
    #allocation2 [shape = 'u8[163840]{0}', space=vmem, size = 0x28000, scoped, tag = 'output window, operand 0']
    loop: start=0, step=1, limit=4
    $region2: #{fnet_forward.1} parent=1 // loop_pre_header
      _
    $region3: #{fnet_forward.1} parent=1 // loop_header
      %s13 = sphi 0, %s17
      %p14 = scmp.ge.s32.totalorder %s13, 4
      %s23 = sphi 0, %s25
      %s26 = sphi 0, %s23
      %s27 = sphi 0, %s26
      %s43 = sphi 0, %s27
      %s47 = sphi 0, %s47
      %s49 = sphi 0, %s47
      %s50 = sphi 0, %s49
      %s64 = sphi 0, %s50
      %s68 = sphi 0, %s68
      %s70 = sphi 0, %s68
      %s71 = sphi 0, %s70
      %s85 = sphi 0, %s71
      %s89 = sphi 0, %s89
      %s91 = sphi 0, %s89
      %s92 = sphi 0, %s91
      %s106 = sphi 0, %s92
      %s110 = sphi 0, %s110
      %s112 = sphi 0, %s110
      %s113 = sphi 0, %s112
      %s127 = sphi 0, %s113
      %s131 = sphi 0, %s131
      %s133 = sphi 0, %s131
      %s134 = sphi 0, %s133
      %s148 = sphi 0, %s134
      %s152 = sphi 0, %s152
      %s154 = sphi 0, %s152
      %s155 = sphi 0, %s154
      %s169 = sphi 0, %s155
      %s175 = sphi 0, %s177
      %s178 = sphi 0, %s175
      %s179 = sphi 0, %s178
      %s195 = sphi 0, %s179
    $region4: #{fnet_forward.1} parent=1 // loop_header_branch
      %16 = sbr.rel (%p14) target = $region8
    $region5: #{fnet_forward.1} parent=1 // loop_body
      %s18 = ssub.s32 %s13, 1
      %s19 = ssub.s32 %s13, 2
      %s20 = sadd.s32 %s13, 1
      %s21 = ssub.s32 %s13, %s20
      %p22 = scmp.eq.s32.totalorder %s21, 0
      %s24 = sadd.s32 %s23, 1
      %s25 = scalar_select %p22, %s23, %s24
      %p28 = pneg %p22
      %p29 = scmp.eq.s32.totalorder %s13, 1
      %p30 = por %p28, %p29
      %p31 = scmp.ne.s32.totalorder %s23, %s26
      %p32 = scmp.eq.s32.totalorder %s13, 0
      %p33 = por %p31, %p32
      %p34 = scmp.ne.s32.totalorder %s23, %s26
      %p35 = scmp.eq.s32.totalorder %s18, 1
      %p36 = por %p34, %p35
      %p37 = scmp.ne.s32.totalorder %s26, %s27
      %p38 = scmp.eq.s32.totalorder %s18, 0
      %p39 = por %p37, %p38
      %p40 = scmp.ne.s32.totalorder %s26, %s27
      %p41 = scmp.eq.s32.totalorder %s19, 1
      %p42 = por %p40, %p41
      %p44 = scmp.ne.s32.totalorder %s27, %s43
      %p45 = scmp.eq.s32.totalorder %s19, 0
      %p46 = por %p44, %p45
      %s48 = sadd.s32 %s47, 1
      %p51 = scmp.eq.s32.totalorder %s13, 1
      %p52 = scmp.ne.s32.totalorder %s47, %s49
      %p53 = scmp.eq.s32.totalorder %s13, 0
      %p54 = por %p52, %p53
      %p55 = scmp.ne.s32.totalorder %s47, %s49
      %p56 = scmp.eq.s32.totalorder %s18, 1
      %p57 = por %p55, %p56
      %p58 = scmp.ne.s32.totalorder %s49, %s50
      %p59 = scmp.eq.s32.totalorder %s18, 0
      %p60 = por %p58, %p59
      %p61 = scmp.ne.s32.totalorder %s49, %s50
      %p62 = scmp.eq.s32.totalorder %s19, 1
      %p63 = por %p61, %p62
      %p65 = scmp.ne.s32.totalorder %s50, %s64
      %p66 = scmp.eq.s32.totalorder %s19, 0
      %p67 = por %p65, %p66
      %s69 = sadd.s32 %s68, 1
      %p72 = scmp.eq.s32.totalorder %s13, 1
      %p73 = scmp.ne.s32.totalorder %s68, %s70
      %p74 = scmp.eq.s32.totalorder %s13, 0
      %p75 = por %p73, %p74
      %p76 = scmp.ne.s32.totalorder %s68, %s70
      %p77 = scmp.eq.s32.totalorder %s18, 1
      %p78 = por %p76, %p77
      %p79 = scmp.ne.s32.totalorder %s70, %s71
      %p80 = scmp.eq.s32.totalorder %s18, 0
      %p81 = por %p79, %p80
      %p82 = scmp.ne.s32.totalorder %s70, %s71
      %p83 = scmp.eq.s32.totalorder %s19, 1
      %p84 = por %p82, %p83
      %p86 = scmp.ne.s32.totalorder %s71, %s85
      %p87 = scmp.eq.s32.totalorder %s19, 0
      %p88 = por %p86, %p87
      %s90 = sadd.s32 %s89, 1
      %p93 = scmp.eq.s32.totalorder %s13, 1
      %p94 = scmp.ne.s32.totalorder %s89, %s91
      %p95 = scmp.eq.s32.totalorder %s13, 0
      %p96 = por %p94, %p95
      %p97 = scmp.ne.s32.totalorder %s89, %s91
      %p98 = scmp.eq.s32.totalorder %s18, 1
      %p99 = por %p97, %p98
      %p100 = scmp.ne.s32.totalorder %s91, %s92
      %p101 = scmp.eq.s32.totalorder %s18, 0
      %p102 = por %p100, %p101
      %p103 = scmp.ne.s32.totalorder %s91, %s92
      %p104 = scmp.eq.s32.totalorder %s19, 1
      %p105 = por %p103, %p104
      %p107 = scmp.ne.s32.totalorder %s92, %s106
      %p108 = scmp.eq.s32.totalorder %s19, 0
      %p109 = por %p107, %p108
      %s111 = sadd.s32 %s110, 1
      %p114 = scmp.eq.s32.totalorder %s13, 1
      %p115 = scmp.ne.s32.totalorder %s110, %s112
      %p116 = scmp.eq.s32.totalorder %s13, 0
      %p117 = por %p115, %p116
      %p118 = scmp.ne.s32.totalorder %s110, %s112
      %p119 = scmp.eq.s32.totalorder %s18, 1
      %p120 = por %p118, %p119
      %p121 = scmp.ne.s32.totalorder %s112, %s113
      %p122 = scmp.eq.s32.totalorder %s18, 0
      %p123 = por %p121, %p122
      %p124 = scmp.ne.s32.totalorder %s112, %s113
      %p125 = scmp.eq.s32.totalorder %s19, 1
      %p126 = por %p124, %p125
      %p128 = scmp.ne.s32.totalorder %s113, %s127
      %p129 = scmp.eq.s32.totalorder %s19, 0
      %p130 = por %p128, %p129
      %s132 = sadd.s32 %s131, 1
      %p135 = scmp.eq.s32.totalorder %s13, 1
      %p136 = scmp.ne.s32.totalorder %s131, %s133
      %p137 = scmp.eq.s32.totalorder %s13, 0
      %p138 = por %p136, %p137
      %p139 = scmp.ne.s32.totalorder %s131, %s133
      %p140 = scmp.eq.s32.totalorder %s18, 1
      %p141 = por %p139, %p140
      %p142 = scmp.ne.s32.totalorder %s133, %s134
      %p143 = scmp.eq.s32.totalorder %s18, 0
      %p144 = por %p142, %p143
      %p145 = scmp.ne.s32.totalorder %s133, %s134
      %p146 = scmp.eq.s32.totalorder %s19, 1
      %p147 = por %p145, %p146
      %p149 = scmp.ne.s32.totalorder %s134, %s148
      %p150 = scmp.eq.s32.totalorder %s19, 0
      %p151 = por %p149, %p150
      %s153 = sadd.s32 %s152, 1
      %p156 = scmp.eq.s32.totalorder %s13, 1
      %p157 = scmp.ne.s32.totalorder %s152, %s154
      %p158 = scmp.eq.s32.totalorder %s13, 0
      %p159 = por %p157, %p158
      %p160 = scmp.ne.s32.totalorder %s152, %s154
      %p161 = scmp.eq.s32.totalorder %s18, 1
      %p162 = por %p160, %p161
      %p163 = scmp.ne.s32.totalorder %s154, %s155
      %p164 = scmp.eq.s32.totalorder %s18, 0
      %p165 = por %p163, %p164
      %p166 = scmp.ne.s32.totalorder %s154, %s155
      %p167 = scmp.eq.s32.totalorder %s19, 1
      %p168 = por %p166, %p167
      %p170 = scmp.ne.s32.totalorder %s155, %s169
      %p171 = scmp.eq.s32.totalorder %s19, 0
      %p172 = por %p170, %p171
      %s173 = ssub.s32 %s13, %s20
      %p174 = scmp.eq.s32.totalorder %s173, 0
      %s176 = sadd.s32 %s175, 1
      %s177 = scalar_select %p174, %s175, %s176
      %p180 = pneg %p174
      %p181 = scmp.eq.s32.totalorder %s13, 1
      %p182 = por %p180, %p181
      %p183 = scmp.ne.s32.totalorder %s175, %s178
      %p184 = scmp.eq.s32.totalorder %s13, 0
      %p185 = por %p183, %p184
      %p186 = scmp.ne.s32.totalorder %s175, %s178
      %p187 = scmp.eq.s32.totalorder %s18, 1
      %p188 = por %p186, %p187
      %p189 = scmp.ne.s32.totalorder %s178, %s179
      %p190 = scmp.eq.s32.totalorder %s18, 0
      %p191 = por %p189, %p190
      %p192 = scmp.ne.s32.totalorder %s178, %s179
      %p193 = scmp.eq.s32.totalorder %s19, 1
      %p194 = por %p192, %p193
      %p196 = scmp.ne.s32.totalorder %s179, %s195
      %p197 = scmp.eq.s32.totalorder %s19, 0
      %p198 = por %p196, %p197
      %p199 = scmp.le.s32.totalorder 1, %s13
      %p200 = scmp.lt.s32.totalorder %s13, 3
      %p201 = pnand %p199, %p200
      %p202 = pneg %p201
      // Predicated region
      $region9: #{fnet_forward.1} parent=5 // pred_check
        _
      $region10: #{fnet_forward.1} parent=5 // pred_check_branch
        %204 = sbr.rel (%p201) target = $region12
      $region11: #{fnet_forward.1} parent=5 // pred_region
        %s205 = ssub.s32 %s13, 1
        // Predicated region
        $region13: #{fnet_forward.1} parent=11 // pred_check
          %p206 = pneg %p60
        $region14: #{fnet_forward.1} parent=11 // pred_check_branch
          %208 = sbr.rel (%p206) target = $region16
        $region15: #{fnet_forward.1} parent=11 // pred_region
          _
        $region16: #{fnet_forward.1} parent=11 // pred_fallthru
          _
        // Predicated region
        $region17: #{fnet_forward.1} parent=11 // pred_check
          %p209 = pneg %p81
        $region18: #{fnet_forward.1} parent=11 // pred_check_branch
          %211 = sbr.rel (%p209) target = $region20
        $region19: #{fnet_forward.1} parent=11 // pred_region
          _
        $region20: #{fnet_forward.1} parent=11 // pred_fallthru
          _
        // Predicated region
        $region21: #{fnet_forward.1} parent=11 // pred_check
          %p212 = pneg %p102
        $region22: #{fnet_forward.1} parent=11 // pred_check_branch
          %214 = sbr.rel (%p212) target = $region24
        $region23: #{fnet_forward.1} parent=11 // pred_region
          _
        $region24: #{fnet_forward.1} parent=11 // pred_fallthru
          _
        // Predicated region
        $region25: #{fnet_forward.1} parent=11 // pred_check
          %p215 = pneg %p123
        $region26: #{fnet_forward.1} parent=11 // pred_check_branch
          %217 = sbr.rel (%p215) target = $region28
        $region27: #{fnet_forward.1} parent=11 // pred_region
          _
        $region28: #{fnet_forward.1} parent=11 // pred_fallthru
          _
        // Predicated region
        $region29: #{fnet_forward.1} parent=11 // pred_check
          %p218 = pneg %p144
        $region30: #{fnet_forward.1} parent=11 // pred_check_branch
          %220 = sbr.rel (%p218) target = $region32
        $region31: #{fnet_forward.1} parent=11 // pred_region
          _
        $region32: #{fnet_forward.1} parent=11 // pred_fallthru
          _
        // Predicated region
        $region33: #{fnet_forward.1} parent=11 // pred_check
          %p221 = pneg %p165
        $region34: #{fnet_forward.1} parent=11 // pred_check_branch
          %223 = sbr.rel (%p221) target = $region36
        $region35: #{fnet_forward.1} parent=11 // pred_region
          _
        $region36: #{fnet_forward.1} parent=11 // pred_fallthru
          _
      $region12: #{fnet_forward.1} parent=5 // pred_fallthru
        _
      %p224 = scmp.lt.s32.totalorder %s13, 2
      // Predicated region
      $region37: #{fnet_forward.1} parent=5 // pred_check
        %p225 = pneg %p224
      $region38: #{fnet_forward.1} parent=5 // pred_check_branch
        %227 = sbr.rel (%p225) target = $region40
      $region39: #{fnet_forward.1} parent=5 // pred_region
        // Predicated region
        $region41: #{fnet_forward.1} parent=39 // pred_check
          %p228 = pneg %p33
        $region42: #{fnet_forward.1} parent=39 // pred_check_branch
          %230 = sbr.rel (%p228) target = $region44
        $region43: #{fnet_forward.1} parent=39 // pred_region
          %s231 = smul.u32 20, %s13
          %s232 = ssub.s32 38, %s231
          %p233 = scmp.lt.s32.totalorder %s232, 20
          %s234 = scalar_select %p233, %s232, 20
          %s235 = smul.u32 128, %s234
          %p236 = scmp.lt.s32.totalorder %s231, 37
          %s237 = scalar_select %p236, %s231, 37
          %s238 = smul.addr %s237, 8
          %s239 = scalar_lea.vmem %s0, %s238
          %s240 = smul.u32 20, %s13
          %s241 = ssub.s32 38, %s240
          %p242 = scmp.lt.s32.totalorder %s241, 20
          %s243 = scalar_select %p242, %s241, 20
          %s244 = smul.u32 128, %s243
        $region44: #{fnet_forward.1} parent=39 // pred_fallthru
          _
      $region40: #{fnet_forward.1} parent=5 // pred_fallthru
        _
      %p245 = scmp.le.s32.totalorder 1, %s13
      %p246 = scmp.lt.s32.totalorder %s13, 3
      %p247 = pnand %p245, %p246
      %p248 = pneg %p247
      // Predicated region
      $region45: #{fnet_forward.1} parent=5 // pred_check
        _
      $region46: #{fnet_forward.1} parent=5 // pred_check_branch
        %250 = sbr.rel (%p247) target = $region48
      $region47: #{fnet_forward.1} parent=5 // pred_region
        %s251 = ssub.s32 %s13, 1
        %s252 = smul.u32 20, %s18
        %s253 = ssub.s32 38, %s252
        %p254 = scmp.lt.s32.totalorder %s253, 20
        %s255 = scalar_select %p254, %s253, 20
        %s256 = smul.u32 128, %s255
        %p257 = scmp.lt.s32.totalorder %s252, 37
        %s258 = scalar_select %p257, %s252, 37
        %s259 = smul.addr %s258, 8
        %s260 = scalar_lea.vmem %s0, %s259
        %p261 = pneg %p39
        %p262 = pneg %p36
        %p263 = pneg %p60
        %p264 = pneg %p57
        %p265 = pneg %p81
        %p266 = pneg %p78
        %p267 = pneg %p102
        %p268 = pneg %p99
        %p269 = pneg %p123
        %p270 = pneg %p120
        %p271 = pneg %p144
        %p272 = pneg %p141
        %p273 = pneg %p165
        %p274 = pneg %p162
        %p275 = pneg %p191
        %p276 = pneg %p188
        %s277 = sand.u32 %s178, 1
        %s278 = sand.u32 %s178, 1
        %s279 = smul.addr %s278, 160
        %s280 = scalar_lea.vmem [#allocation2], %s279
        %s281 = smul.u32 20, %s18
        %s282 = ssub.s32 38, %s281
        %p283 = scmp.lt.s32.totalorder %s282, 20
        %s284 = scalar_select %p283, %s282, 20
        %s285 = smul.u32 128, %s284
        %p286 = scmp.lt.s32.totalorder %s281, 37
        %s287 = scalar_select %p286, %s281, 37
        %s288 = smul.addr %s287, 8
        %s289 = scalar_lea.vmem %s0, %s288
        %s290 = smul.u32 20, %s18
        %s291 = ssub.s32 38, %s290
        %p292 = scmp.lt.s32.totalorder %s291, 20
        %s293 = scalar_select %p292, %s291, 20
        %s294 = smul.u32 128, %s293
        %s295 = smul.u32 20, %s18
        %s296 = ssub.s32 38, %s295
        %p297 = scmp.lt.s32.totalorder %s296, 20
        %s298 = scalar_select %p297, %s296, 20
        %s299 = smul.u32 128, %s298
        %v301 = vld [vmem:[%s289] sm:$0xff]
        %v302 = vld [vmem:[%s289 + $0x8] sm:$0xff]
        %v303 = vld [vmem:[%s289 + $0x10] sm:$0xff]
        %v304 = vld [vmem:[%s289 + $0x18] sm:$0xff]
        %v305 = vld [vmem:[%s289 + $0x20] sm:$0xff]
        %v306 = vld [vmem:[%s289 + $0x28] sm:$0xff]
        %v307 = vld [vmem:[%s289 + $0x30] sm:$0xff]
        %v308 = vld [vmem:[%s289 + $0x38] sm:$0xff]
        %v309 = vld [vmem:[%s289 + $0x40] sm:$0xff]
        %v310 = vld [vmem:[%s289 + $0x48] sm:$0xff]
        %v311 = vld [vmem:[%s289 + $0x50] sm:$0xff]
        %v312 = vld [vmem:[%s289 + $0x58] sm:$0xff]
        %v313 = vld [vmem:[%s289 + $0x60] sm:$0xff]
        %v314 = vld [vmem:[%s289 + $0x68] sm:$0xff]
        %v315 = vld [vmem:[%s289 + $0x70] sm:$0xff]
        %v316 = vld [vmem:[%s289 + $0x78] sm:$0xff]
        %v317 = vld [vmem:[%s289 + $0x80] sm:$0xff]
        %v318 = vld [vmem:[%s289 + $0x88] sm:$0xff]
        %v319 = vld [vmem:[%s289 + $0x90] sm:$0xff]
        %v320 = vld [vmem:[%s289 + $0x98] sm:$0xff]
        %v321 = vpack.c.bf16 %v302, %v301
        %v322 = vpack.c.bf16 %v304, %v303
        %v323 = vpack.c.bf16 %v306, %v305
        %v324 = vpack.c.bf16 %v308, %v307
        %v325 = vpack.c.bf16 %v310, %v309
        %v326 = vpack.c.bf16 %v312, %v311
        %v327 = vpack.c.bf16 %v314, %v313
        %v328 = vpack.c.bf16 %v316, %v315
        %v329 = vpack.c.bf16 %v318, %v317
        %v330 = vpack.c.bf16 %v320, %v319
        %v331 = vld [vmem:[%s1] sm:$0xf]
        %v332 = vld [vmem:[%s1 + $0x4] sm:$0xf]
        %v333 = vld [vmem:[%s1 + $0x8] sm:$0xf]
        %v334 = vld [vmem:[%s1 + $0xc] sm:$0xf]
        %v335 = vld [vmem:[%s2] sm:$0x1]
        %v337 = vlaneseq
        %v338 = vshrl.u32 %v337, 7
        %v339 = vsub.s32 0, %v338
        %v340 = vrot.slane %v335, %v339
        %v346 = vunpack.c.l.b16 %v331
        %v347 = vunpack.c.l.b16 %v332
        %v348 = vunpack.c.l.b16 %v333
        %v349 = vunpack.c.l.b16 %v334
        %v350 = vpack.c.b16 %v347, %v346
        %v351 = vpack.c.b16 %v349, %v348
        %vm354 = vcmask 261120
        %v356 = vsel %vm354, %v321, 0
        %v359 = vsel %vm354, %v322, 0
        %v362 = vsel %vm354, %v323, 0
        %v365 = vsel %vm354, %v324, 0
        %v368 = vsel %vm354, %v325, 0
        %v371 = vsel %vm354, %v326, 0
        %v374 = vsel %vm354, %v327, 0
        %v377 = vsel %vm354, %v328, 0
        %v380 = vsel %vm354, %v329, 0
        %v383 = vsel %vm354, %v330, 0
        %385 = vmatprep.subr.bf16.mxu0 0
        %386 = vmatpush1.bf16.msra.mxu0 %v350
        %387 = vmatprep.subr.bf16.mxu0 0
        %388 = vmatpush1.bf16.msra.mxu0 %v351
        %389 = vmatprep.subr.bf16.mxu0 0
        %390 = vmatpush1.bf16.msra.mxu0 0
        %391 = vmatprep.subr.bf16.mxu0 0
        %392 = vmatpush1.bf16.msra.mxu0 0
        %393 = vmatprep.subr.bf16.mxu0 0
        %394 = vmatpush1.bf16.msra.mxu0 0
        %395 = vmatprep.subr.bf16.mxu0 0
        %396 = vmatpush1.bf16.msra.mxu0 0
        %397 = vmatprep.subr.bf16.mxu0 0
        %398 = vmatpush1.bf16.msra.mxu0 0
        %399 = vmatprep.subr.bf16.mxu0 0
        %400 = vmatpush1.bf16.msra.mxu0 0
        %401 = vmatprep.subr.bf16.mxu0 0
        %402 = vmatpush1.bf16.msra.mxu0 0
        %403 = vmatprep.subr.bf16.mxu0 0
        %404 = vmatpush1.bf16.msra.mxu0 0
        %405 = vmatprep.subr.bf16.mxu0 0
        %406 = vmatpush1.bf16.msra.mxu0 0
        %407 = vmatprep.subr.bf16.mxu0 0
        %408 = vmatpush1.bf16.msra.mxu0 0
        %409 = vmatprep.subr.bf16.mxu0 0
        %410 = vmatpush1.bf16.msra.mxu0 0
        %411 = vmatprep.subr.bf16.mxu0 0
        %412 = vmatpush1.bf16.msra.mxu0 0
        %413 = vmatprep.subr.bf16.mxu0 0
        %414 = vmatpush1.bf16.msra.mxu0 0
        %415 = vmatprep.subr.bf16.mxu0 0
        %416 = vmatpush1.bf16.msra.mxu0 0
        %417 = vmatprep.mubr.bf16.mxu0 0
        %418 = vmatmul.mubr.bf16.gmra.mrb[0].mxu0 %v356
        %v419 = vpop.f32.mrb[0].mxu0
        %v420 = vadd.f32 %v340, %v419
        %v421 = vpop.f32.mrb[0].mxu0
        %v422 = vpop.f32.mrb[0].mxu0
        %v423 = vadd.f32 %v340, %v422
        %v424 = vpop.f32.mrb[0].mxu0
        %425 = vmatprep.mubr.bf16.mxu0 0
        %426 = vmatmul.mubr.bf16.gmra.mrb[0].mxu0 %v359
        %v427 = vpop.f32.mrb[0].mxu0
        %v428 = vadd.f32 %v340, %v427
        %v429 = vpop.f32.mrb[0].mxu0
        %v430 = vpop.f32.mrb[0].mxu0
        %v431 = vadd.f32 %v340, %v430
        %v432 = vpop.f32.mrb[0].mxu0
        %433 = vmatprep.mubr.bf16.mxu0 0
        %434 = vmatmul.mubr.bf16.gmra.mrb[0].mxu0 %v362
        %v435 = vpop.f32.mrb[0].mxu0
        %v436 = vadd.f32 %v340, %v435
        %v437 = vpop.f32.mrb[0].mxu0
        %v438 = vpop.f32.mrb[0].mxu0
        %v439 = vadd.f32 %v340, %v438
        %v440 = vpop.f32.mrb[0].mxu0
        %441 = vmatprep.mubr.bf16.mxu0 0
        %442 = vmatmul.mubr.bf16.gmra.mrb[0].mxu0 %v365
        %v443 = vpop.f32.mrb[0].mxu0
        %v444 = vadd.f32 %v340, %v443
        %v445 = vpop.f32.mrb[0].mxu0
        %v446 = vpop.f32.mrb[0].mxu0
        %v447 = vadd.f32 %v340, %v446
        %v448 = vpop.f32.mrb[0].mxu0
        %449 = vmatprep.mubr.bf16.mxu0 0
        %450 = vmatmul.mubr.bf16.gmra.mrb[0].mxu0 %v368
        %v451 = vpop.f32.mrb[0].mxu0
        %v452 = vadd.f32 %v340, %v451
        %v453 = vpop.f32.mrb[0].mxu0
        %v454 = vpop.f32.mrb[0].mxu0
        %v455 = vadd.f32 %v340, %v454
        %v456 = vpop.f32.mrb[0].mxu0
        %457 = vmatprep.mubr.bf16.mxu0 0
        %458 = vmatmul.mubr.bf16.gmra.mrb[0].mxu0 %v371
        %v459 = vpop.f32.mrb[0].mxu0
        %v460 = vadd.f32 %v340, %v459
        %v461 = vpop.f32.mrb[0].mxu0
        %v462 = vpop.f32.mrb[0].mxu0
        %v463 = vadd.f32 %v340, %v462
        %v464 = vpop.f32.mrb[0].mxu0
        %465 = vmatprep.mubr.bf16.mxu0 0
        %466 = vmatmul.mubr.bf16.gmra.mrb[0].mxu0 %v374
        %v467 = vpop.f32.mrb[0].mxu0
        %v468 = vadd.f32 %v340, %v467
        %v469 = vpop.f32.mrb[0].mxu0
        %v470 = vpop.f32.mrb[0].mxu0
        %v471 = vadd.f32 %v340, %v470
        %v472 = vpop.f32.mrb[0].mxu0
        %473 = vmatprep.mubr.bf16.mxu0 0
        %474 = vmatmul.mubr.bf16.gmra.mrb[0].mxu0 %v377
        %v475 = vpop.f32.mrb[0].mxu0
        %v476 = vadd.f32 %v340, %v475
        %v477 = vpop.f32.mrb[0].mxu0
        %v478 = vpop.f32.mrb[0].mxu0
        %v479 = vadd.f32 %v340, %v478
        %v480 = vpop.f32.mrb[0].mxu0
        %481 = vmatprep.mubr.bf16.mxu0 0
        %482 = vmatmul.mubr.bf16.gmra.mrb[0].mxu0 %v380
        %v483 = vpop.f32.mrb[0].mxu0
        %v484 = vadd.f32 %v340, %v483
        %v485 = vpop.f32.mrb[0].mxu0
        %v486 = vpop.f32.mrb[0].mxu0
        %v487 = vadd.f32 %v340, %v486
        %v488 = vpop.f32.mrb[0].mxu0
        %489 = vmatprep.mubr.bf16.mxu0 0
        %490 = vmatmul.mubr.bf16.gmra.mrb[0].mxu0 %v383
        %v491 = vpop.f32.mrb[0].mxu0
        %v492 = vadd.f32 %v340, %v491
        %v493 = vpop.f32.mrb[0].mxu0
        %v494 = vpop.f32.mrb[0].mxu0
        %v495 = vadd.f32 %v340, %v494
        %v496 = vpop.f32.mrb[0].mxu0
        %497 = vdwg.mxu0
        %v498 = vmax.f32 %v420, 0.0
        %v499 = vmax.f32 %v423, 0.0
        %v500 = vmax.f32 %v428, 0.0
        %v501 = vmax.f32 %v431, 0.0
        %v502 = vmax.f32 %v436, 0.0
        %v503 = vmax.f32 %v439, 0.0
        %v504 = vmax.f32 %v444, 0.0
        %v505 = vmax.f32 %v447, 0.0
        %v506 = vmax.f32 %v452, 0.0
        %v507 = vmax.f32 %v455, 0.0
        %v508 = vmax.f32 %v460, 0.0
        %v509 = vmax.f32 %v463, 0.0
        %v510 = vmax.f32 %v468, 0.0
        %v511 = vmax.f32 %v471, 0.0
        %v512 = vmax.f32 %v476, 0.0
        %v513 = vmax.f32 %v479, 0.0
        %v514 = vmax.f32 %v484, 0.0
        %v515 = vmax.f32 %v487, 0.0
        %v516 = vmax.f32 %v492, 0.0
        %v517 = vmax.f32 %v495, 0.0
        %v518 = vpack.c.bf16 %v499, %v498
        %v519 = vpack.c.bf16 %v501, %v500
        %v520 = vpack.c.bf16 %v503, %v502
        %v521 = vpack.c.bf16 %v505, %v504
        %v522 = vpack.c.bf16 %v507, %v506
        %v523 = vpack.c.bf16 %v509, %v508
        %v524 = vpack.c.bf16 %v511, %v510
        %v525 = vpack.c.bf16 %v513, %v512
        %v526 = vpack.c.bf16 %v515, %v514
        %v527 = vpack.c.bf16 %v517, %v516
        %v528 = vld [vmem:[%s3] sm:$0xf]
        %v529 = vld [vmem:[%s3 + $0x4] sm:$0xf]
        %v530 = vld [vmem:[%s3 + $0x8] sm:$0xf]
        %v531 = vld [vmem:[%s3 + $0xc] sm:$0xf]
        %v532 = vld [vmem:[%s3 + $0x10] sm:$0xf]
        %v533 = vld [vmem:[%s3 + $0x14] sm:$0xf]
        %v534 = vld [vmem:[%s3 + $0x18] sm:$0xf]
        %v535 = vld [vmem:[%s3 + $0x1c] sm:$0xf]
        %v536 = vld [vmem:[%s4] sm:$0x1]
        %v538 = vlaneseq
        %v539 = vshrl.u32 %v538, 7
        %v540 = vsub.s32 0, %v539
        %v541 = vrot.slane %v536, %v540
        %v551 = vunpack.c.l.b16 %v528
        %v552 = vunpack.c.l.b16 %v529
        %v553 = vunpack.c.l.b16 %v530
        %v554 = vunpack.c.l.b16 %v531
        %v555 = vunpack.c.l.b16 %v532
        %v556 = vunpack.c.l.b16 %v533
        %v557 = vunpack.c.l.b16 %v534
        %v558 = vunpack.c.l.b16 %v535
        %v559 = vpack.c.b16 %v552, %v551
        %v560 = vpack.c.b16 %v554, %v553
        %v561 = vpack.c.b16 %v556, %v555
        %v562 = vpack.c.b16 %v558, %v557
        %vm567 = vcmask 523264
        %v569 = vsel %vm567, %v518, 0
        %v572 = vsel %vm567, %v519, 0
        %v575 = vsel %vm567, %v520, 0
        %v578 = vsel %vm567, %v521, 0
        %v581 = vsel %vm567, %v522, 0
        %v584 = vsel %vm567, %v523, 0
        %v587 = vsel %vm567, %v524, 0
        %v590 = vsel %vm567, %v525, 0
        %v593 = vsel %vm567, %v526, 0
        %v596 = vsel %vm567, %v527, 0
        %598 = vmatprep.subr.bf16.mxu0 0
        %599 = vmatpush1.bf16.msra.mxu0 %v559
        %600 = vmatprep.subr.bf16.mxu0 0
        %601 = vmatpush1.bf16.msra.mxu0 %v560
        %602 = vmatprep.subr.bf16.mxu0 0
        %603 = vmatpush1.bf16.msra.mxu0 %v561
        %604 = vmatprep.subr.bf16.mxu0 0
        %605 = vmatpush1.bf16.msra.mxu0 %v562
        %606 = vmatprep.subr.bf16.mxu0 0
        %607 = vmatpush1.bf16.msra.mxu0 0
        %608 = vmatprep.subr.bf16.mxu0 0
        %609 = vmatpush1.bf16.msra.mxu0 0
        %610 = vmatprep.subr.bf16.mxu0 0
        %611 = vmatpush1.bf16.msra.mxu0 0
        %612 = vmatprep.subr.bf16.mxu0 0
        %613 = vmatpush1.bf16.msra.mxu0 0
        %614 = vmatprep.subr.bf16.mxu0 0
        %615 = vmatpush1.bf16.msra.mxu0 0
        %616 = vmatprep.subr.bf16.mxu0 0
        %617 = vmatpush1.bf16.msra.mxu0 0
        %618 = vmatprep.subr.bf16.mxu0 0
        %619 = vmatpush1.bf16.msra.mxu0 0
        %620 = vmatprep.subr.bf16.mxu0 0
        %621 = vmatpush1.bf16.msra.mxu0 0
        %622 = vmatprep.subr.bf16.mxu0 0
        %623 = vmatpush1.bf16.msra.mxu0 0
        %624 = vmatprep.subr.bf16.mxu0 0
        %625 = vmatpush1.bf16.msra.mxu0 0
        %626 = vmatprep.subr.bf16.mxu0 0
        %627 = vmatpush1.bf16.msra.mxu0 0
        %628 = vmatprep.subr.bf16.mxu0 0
        %629 = vmatpush1.bf16.msra.mxu0 0
        %630 = vmatprep.mubr.bf16.mxu0 0
        %631 = vmatmul.mubr.bf16.gmra.mrb[0].mxu0 %v569
        %v632 = vpop.f32.mrb[0].mxu0
        %v633 = vadd.f32 %v541, %v632
        %v634 = vpop.f32.mrb[0].mxu0
        %v635 = vpop.f32.mrb[0].mxu0
        %v636 = vadd.f32 %v541, %v635
        %v637 = vpop.f32.mrb[0].mxu0
        %638 = vmatprep.mubr.bf16.mxu0 0
        %639 = vmatmul.mubr.bf16.gmra.mrb[0].mxu0 %v572
        %v640 = vpop.f32.mrb[0].mxu0
        %v641 = vadd.f32 %v541, %v640
        %v642 = vpop.f32.mrb[0].mxu0
        %v643 = vpop.f32.mrb[0].mxu0
        %v644 = vadd.f32 %v541, %v643
        %v645 = vpop.f32.mrb[0].mxu0
        %646 = vmatprep.mubr.bf16.mxu0 0
        %647 = vmatmul.mubr.bf16.gmra.mrb[0].mxu0 %v575
        %v648 = vpop.f32.mrb[0].mxu0
        %v649 = vadd.f32 %v541, %v648
        %v650 = vpop.f32.mrb[0].mxu0
        %v651 = vpop.f32.mrb[0].mxu0
        %v652 = vadd.f32 %v541, %v651
        %v653 = vpop.f32.mrb[0].mxu0
        %654 = vmatprep.mubr.bf16.mxu0 0
        %655 = vmatmul.mubr.bf16.gmra.mrb[0].mxu0 %v578
        %v656 = vpop.f32.mrb[0].mxu0
        %v657 = vadd.f32 %v541, %v656
        %v658 = vpop.f32.mrb[0].mxu0
        %v659 = vpop.f32.mrb[0].mxu0
        %v660 = vadd.f32 %v541, %v659
        %v661 = vpop.f32.mrb[0].mxu0
        %662 = vmatprep.mubr.bf16.mxu0 0
        %663 = vmatmul.mubr.bf16.gmra.mrb[0].mxu0 %v581
        %v664 = vpop.f32.mrb[0].mxu0
        %v665 = vadd.f32 %v541, %v664
        %v666 = vpop.f32.mrb[0].mxu0
        %v667 = vpop.f32.mrb[0].mxu0
        %v668 = vadd.f32 %v541, %v667
        %v669 = vpop.f32.mrb[0].mxu0
        %670 = vmatprep.mubr.bf16.mxu0 0
        %671 = vmatmul.mubr.bf16.gmra.mrb[0].mxu0 %v584
        %v672 = vpop.f32.mrb[0].mxu0
        %v673 = vadd.f32 %v541, %v672
        %v674 = vpop.f32.mrb[0].mxu0
        %v675 = vpop.f32.mrb[0].mxu0
        %v676 = vadd.f32 %v541, %v675
        %v677 = vpop.f32.mrb[0].mxu0
        %678 = vmatprep.mubr.bf16.mxu0 0
        %679 = vmatmul.mubr.bf16.gmra.mrb[0].mxu0 %v587
        %v680 = vpop.f32.mrb[0].mxu0
        %v681 = vadd.f32 %v541, %v680
        %v682 = vpop.f32.mrb[0].mxu0
        %v683 = vpop.f32.mrb[0].mxu0
        %v684 = vadd.f32 %v541, %v683
        %v685 = vpop.f32.mrb[0].mxu0
        %686 = vmatprep.mubr.bf16.mxu0 0
        %687 = vmatmul.mubr.bf16.gmra.mrb[0].mxu0 %v590
        %v688 = vpop.f32.mrb[0].mxu0
        %v689 = vadd.f32 %v541, %v688
        %v690 = vpop.f32.mrb[0].mxu0
        %v691 = vpop.f32.mrb[0].mxu0
        %v692 = vadd.f32 %v541, %v691
        %v693 = vpop.f32.mrb[0].mxu0
        %694 = vmatprep.mubr.bf16.mxu0 0
        %695 = vmatmul.mubr.bf16.gmra.mrb[0].mxu0 %v593
        %v696 = vpop.f32.mrb[0].mxu0
        %v697 = vadd.f32 %v541, %v696
        %v698 = vpop.f32.mrb[0].mxu0
        %v699 = vpop.f32.mrb[0].mxu0
        %v700 = vadd.f32 %v541, %v699
        %v701 = vpop.f32.mrb[0].mxu0
        %702 = vmatprep.mubr.bf16.mxu0 0
        %703 = vmatmul.mubr.bf16.gmra.mrb[0].mxu0 %v596
        %v704 = vpop.f32.mrb[0].mxu0
        %v705 = vadd.f32 %v541, %v704
        %v706 = vpop.f32.mrb[0].mxu0
        %v707 = vpop.f32.mrb[0].mxu0
        %v708 = vadd.f32 %v541, %v707
        %v709 = vpop.f32.mrb[0].mxu0
        %710 = vdwg.mxu0
        %v711 = vmax.f32 %v633, 0.0
        %v712 = vmax.f32 %v636, 0.0
        %v713 = vmax.f32 %v641, 0.0
        %v714 = vmax.f32 %v644, 0.0
        %v715 = vmax.f32 %v649, 0.0
        %v716 = vmax.f32 %v652, 0.0
        %v717 = vmax.f32 %v657, 0.0
        %v718 = vmax.f32 %v660, 0.0
        %v719 = vmax.f32 %v665, 0.0
        %v720 = vmax.f32 %v668, 0.0
        %v721 = vmax.f32 %v673, 0.0
        %v722 = vmax.f32 %v676, 0.0
        %v723 = vmax.f32 %v681, 0.0
        %v724 = vmax.f32 %v684, 0.0
        %v725 = vmax.f32 %v689, 0.0
        %v726 = vmax.f32 %v692, 0.0
        %v727 = vmax.f32 %v697, 0.0
        %v728 = vmax.f32 %v700, 0.0
        %v729 = vmax.f32 %v705, 0.0
        %v730 = vmax.f32 %v708, 0.0
        %v731 = vpack.c.bf16 %v712, %v711
        %v732 = vpack.c.bf16 %v714, %v713
        %v733 = vpack.c.bf16 %v716, %v715
        %v734 = vpack.c.bf16 %v718, %v717
        %v735 = vpack.c.bf16 %v720, %v719
        %v736 = vpack.c.bf16 %v722, %v721
        %v737 = vpack.c.bf16 %v724, %v723
        %v738 = vpack.c.bf16 %v726, %v725
        %v739 = vpack.c.bf16 %v728, %v727
        %v740 = vpack.c.bf16 %v730, %v729
        %v741 = vld [vmem:[%s5] sm:$0xf]
        %v742 = vld [vmem:[%s5 + $0x4] sm:$0xf]
        %v743 = vld [vmem:[%s5 + $0x8] sm:$0xf]
        %v744 = vld [vmem:[%s5 + $0xc] sm:$0xf]
        %v745 = vld [vmem:[%s5 + $0x10] sm:$0xf]
        %v746 = vld [vmem:[%s5 + $0x14] sm:$0xf]
        %v747 = vld [vmem:[%s5 + $0x18] sm:$0xf]
        %v748 = vld [vmem:[%s5 + $0x1c] sm:$0xf]
        %v749 = vld [vmem:[%s6] sm:$0x1]
        %v751 = vlaneseq
        %v752 = vshrl.u32 %v751, 7
        %v753 = vsub.s32 0, %v752
        %v754 = vrot.slane %v749, %v753
        %v764 = vunpack.c.l.b16 %v741
        %v765 = vunpack.c.l.b16 %v742
        %v766 = vunpack.c.l.b16 %v743
        %v767 = vunpack.c.l.b16 %v744
        %v768 = vunpack.c.l.b16 %v745
        %v769 = vunpack.c.l.b16 %v746
        %v770 = vunpack.c.l.b16 %v747
        %v771 = vunpack.c.l.b16 %v748
        %v772 = vpack.c.b16 %v765, %v764
        %v773 = vpack.c.b16 %v767, %v766
        %v774 = vpack.c.b16 %v769, %v768
        %v775 = vpack.c.b16 %v771, %v770
        %v781 = vsel %vm567, %v731, 0
        %v784 = vsel %vm567, %v732, 0
        %v787 = vsel %vm567, %v733, 0
        %v790 = vsel %vm567, %v734, 0
        %v793 = vsel %vm567, %v735, 0
        %v796 = vsel %vm567, %v736, 0
        %v799 = vsel %vm567, %v737, 0
        %v802 = vsel %vm567, %v738, 0
        %v805 = vsel %vm567, %v739, 0
        %v808 = vsel %vm567, %v740, 0
        %810 = vmatprep.subr.bf16.mxu0 0
        %811 = vmatpush1.bf16.msra.mxu0 %v772
        %812 = vmatprep.subr.bf16.mxu0 0
        %813 = vmatpush1.bf16.msra.mxu0 %v773
        %814 = vmatprep.subr.bf16.mxu0 0
        %815 = vmatpush1.bf16.msra.mxu0 %v774
        %816 = vmatprep.subr.bf16.mxu0 0
        %817 = vmatpush1.bf16.msra.mxu0 %v775
        %818 = vmatprep.subr.bf16.mxu0 0
        %819 = vmatpush1.bf16.msra.mxu0 0
        %820 = vmatprep.subr.bf16.mxu0 0
        %821 = vmatpush1.bf16.msra.mxu0 0
        %822 = vmatprep.subr.bf16.mxu0 0
        %823 = vmatpush1.bf16.msra.mxu0 0
        %824 = vmatprep.subr.bf16.mxu0 0
        %825 = vmatpush1.bf16.msra.mxu0 0
        %826 = vmatprep.subr.bf16.mxu0 0
        %827 = vmatpush1.bf16.msra.mxu0 0
        %828 = vmatprep.subr.bf16.mxu0 0
        %829 = vmatpush1.bf16.msra.mxu0 0
        %830 = vmatprep.subr.bf16.mxu0 0
        %831 = vmatpush1.bf16.msra.mxu0 0
        %832 = vmatprep.subr.bf16.mxu0 0
        %833 = vmatpush1.bf16.msra.mxu0 0
        %834 = vmatprep.subr.bf16.mxu0 0
        %835 = vmatpush1.bf16.msra.mxu0 0
        %836 = vmatprep.subr.bf16.mxu0 0
        %837 = vmatpush1.bf16.msra.mxu0 0
        %838 = vmatprep.subr.bf16.mxu0 0
        %839 = vmatpush1.bf16.msra.mxu0 0
        %840 = vmatprep.subr.bf16.mxu0 0
        %841 = vmatpush1.bf16.msra.mxu0 0
        %842 = vmatprep.mubr.bf16.mxu0 0
        %843 = vmatmul.mubr.bf16.gmra.mrb[0].mxu0 %v781
        %v844 = vpop.f32.mrb[0].mxu0
        %v845 = vadd.f32 %v754, %v844
        %v846 = vpop.f32.mrb[0].mxu0
        %v847 = vpop.f32.mrb[0].mxu0
        %v848 = vadd.f32 %v754, %v847
        %v849 = vpop.f32.mrb[0].mxu0
        %850 = vmatprep.mubr.bf16.mxu0 0
        %851 = vmatmul.mubr.bf16.gmra.mrb[0].mxu0 %v784
        %v852 = vpop.f32.mrb[0].mxu0
        %v853 = vadd.f32 %v754, %v852
        %v854 = vpop.f32.mrb[0].mxu0
        %v855 = vpop.f32.mrb[0].mxu0
        %v856 = vadd.f32 %v754, %v855
        %v857 = vpop.f32.mrb[0].mxu0
        %858 = vmatprep.mubr.bf16.mxu0 0
        %859 = vmatmul.mubr.bf16.gmra.mrb[0].mxu0 %v787
        %v860 = vpop.f32.mrb[0].mxu0
        %v861 = vadd.f32 %v754, %v860
        %v862 = vpop.f32.mrb[0].mxu0
        %v863 = vpop.f32.mrb[0].mxu0
        %v864 = vadd.f32 %v754, %v863
        %v865 = vpop.f32.mrb[0].mxu0
        %866 = vmatprep.mubr.bf16.mxu0 0
        %867 = vmatmul.mubr.bf16.gmra.mrb[0].mxu0 %v790
        %v868 = vpop.f32.mrb[0].mxu0
        %v869 = vadd.f32 %v754, %v868
        %v870 = vpop.f32.mrb[0].mxu0
        %v871 = vpop.f32.mrb[0].mxu0
        %v872 = vadd.f32 %v754, %v871
        %v873 = vpop.f32.mrb[0].mxu0
        %874 = vmatprep.mubr.bf16.mxu0 0
        %875 = vmatmul.mubr.bf16.gmra.mrb[0].mxu0 %v793
        %v876 = vpop.f32.mrb[0].mxu0
        %v877 = vadd.f32 %v754, %v876
        %v878 = vpop.f32.mrb[0].mxu0
        %v879 = vpop.f32.mrb[0].mxu0
        %v880 = vadd.f32 %v754, %v879
        %v881 = vpop.f32.mrb[0].mxu0
        %882 = vmatprep.mubr.bf16.mxu0 0
        %883 = vmatmul.mubr.bf16.gmra.mrb[0].mxu0 %v796
        %v884 = vpop.f32.mrb[0].mxu0
        %v885 = vadd.f32 %v754, %v884
        %v886 = vpop.f32.mrb[0].mxu0
        %v887 = vpop.f32.mrb[0].mxu0
        %v888 = vadd.f32 %v754, %v887
        %v889 = vpop.f32.mrb[0].mxu0
        %890 = vmatprep.mubr.bf16.mxu0 0
        %891 = vmatmul.mubr.bf16.gmra.mrb[0].mxu0 %v799
        %v892 = vpop.f32.mrb[0].mxu0
        %v893 = vadd.f32 %v754, %v892
        %v894 = vpop.f32.mrb[0].mxu0
        %v895 = vpop.f32.mrb[0].mxu0
        %v896 = vadd.f32 %v754, %v895
        %v897 = vpop.f32.mrb[0].mxu0
        %898 = vmatprep.mubr.bf16.mxu0 0
        %899 = vmatmul.mubr.bf16.gmra.mrb[0].mxu0 %v802
        %v900 = vpop.f32.mrb[0].mxu0
        %v901 = vadd.f32 %v754, %v900
        %v902 = vpop.f32.mrb[0].mxu0
        %v903 = vpop.f32.mrb[0].mxu0
        %v904 = vadd.f32 %v754, %v903
        %v905 = vpop.f32.mrb[0].mxu0
        %906 = vmatprep.mubr.bf16.mxu0 0
        %907 = vmatmul.mubr.bf16.gmra.mrb[0].mxu0 %v805
        %v908 = vpop.f32.mrb[0].mxu0
        %v909 = vadd.f32 %v754, %v908
        %v910 = vpop.f32.mrb[0].mxu0
        %v911 = vpop.f32.mrb[0].mxu0
        %v912 = vadd.f32 %v754, %v911
        %v913 = vpop.f32.mrb[0].mxu0
        %914 = vmatprep.mubr.bf16.mxu0 0
        %915 = vmatmul.mubr.bf16.gmra.mrb[0].mxu0 %v808
        %v916 = vpop.f32.mrb[0].mxu0
        %v917 = vadd.f32 %v754, %v916
        %v918 = vpop.f32.mrb[0].mxu0
        %v919 = vpop.f32.mrb[0].mxu0
        %v920 = vadd.f32 %v754, %v919
        %v921 = vpop.f32.mrb[0].mxu0
        %922 = vdwg.mxu0
        %923 = vst.msk [vmem:[%s280] sm:$0xff] %vm354, %v845
        %924 = vst.msk [vmem:[%s280 + $0x8] sm:$0xff] %vm354, %v848
        %925 = vst.msk [vmem:[%s280 + $0x10] sm:$0xff] %vm354, %v853
        %926 = vst.msk [vmem:[%s280 + $0x18] sm:$0xff] %vm354, %v856
        %927 = vst.msk [vmem:[%s280 + $0x20] sm:$0xff] %vm354, %v861
        %928 = vst.msk [vmem:[%s280 + $0x28] sm:$0xff] %vm354, %v864
        %929 = vst.msk [vmem:[%s280 + $0x30] sm:$0xff] %vm354, %v869
        %930 = vst.msk [vmem:[%s280 + $0x38] sm:$0xff] %vm354, %v872
        %931 = vst.msk [vmem:[%s280 + $0x40] sm:$0xff] %vm354, %v877
        %932 = vst.msk [vmem:[%s280 + $0x48] sm:$0xff] %vm354, %v880
        %933 = vst.msk [vmem:[%s280 + $0x50] sm:$0xff] %vm354, %v885
        %934 = vst.msk [vmem:[%s280 + $0x58] sm:$0xff] %vm354, %v888
        %935 = vst.msk [vmem:[%s280 + $0x60] sm:$0xff] %vm354, %v893
        %936 = vst.msk [vmem:[%s280 + $0x68] sm:$0xff] %vm354, %v896
        %937 = vst.msk [vmem:[%s280 + $0x70] sm:$0xff] %vm354, %v901
        %938 = vst.msk [vmem:[%s280 + $0x78] sm:$0xff] %vm354, %v904
        %939 = vst.msk [vmem:[%s280 + $0x80] sm:$0xff] %vm354, %v909
        %940 = vst.msk [vmem:[%s280 + $0x88] sm:$0xff] %vm354, %v912
        %941 = vst.msk [vmem:[%s280 + $0x90] sm:$0xff] %vm354, %v917
        %942 = vst.msk [vmem:[%s280 + $0x98] sm:$0xff] %vm354, %v920
        %s943 = sand.u32 %s178, 1
        %s944 = sand.u32 %s178, 1
        %s945 = smul.addr %s944, 160
        %s946 = scalar_lea.vmem [#allocation2], %s945
        // Predicated region
        $region49: #{fnet_forward.1} parent=47 // pred_check
          %p947 = pneg %p188
        $region50: #{fnet_forward.1} parent=47 // pred_check_branch
          %949 = sbr.rel (%p947) target = $region52
        $region51: #{fnet_forward.1} parent=47 // pred_region
          %s950 = smul.u32 20, %s18
          %s951 = ssub.s32 38, %s950
          %p952 = scmp.lt.s32.totalorder %s951, 20
          %s953 = scalar_select %p952, %s951, 20
          %s954 = smul.u32 128, %s953
          %p955 = scmp.ne.s32.totalorder 0, %s954
          %s956 = smul.addr %s950, 8
          %s957 = scalar_lea.vmem %s7, %s956
          // Predicated region
          $region53: #{fnet_forward.1} parent=51 // pred_check
            %p958 = pneg %p955
          $region54: #{fnet_forward.1} parent=51 // pred_check_branch
            %960 = sbr.rel (%p958) target = $region56
          $region55: #{fnet_forward.1} parent=51 // pred_region
            // Predicated region
            $region57: #{fnet_forward.1} parent=55 // pred_check
              _
            $region58: #{fnet_forward.1} parent=55 // pred_check_branch
              %962 = sbr.rel (0) target = $region60
            $region59: #{fnet_forward.1} parent=55 // pred_region
              // Predicated region
              $region79: #{fnet_forward.1} parent=59 // pred_check
                _
              $region80: #{fnet_forward.1} parent=59 // pred_check_branch
                %1050 = sbr.rel (0) target = $region82
              $region81: #{fnet_forward.1} parent=59 // pred_region
                %s1051 = sdiv.u32.pop %s953, 20
                %s1052 = srem.u32.pop %s953, 20
                // While loop
                $region83: #{fnet_forward.1} parent=81 // loop_pre_header
                  _
                $region84: #{fnet_forward.1} parent=81 // loop_header
                  %s1054 = sphi 0, %s1056
                  %p1055 = scmp.ge.s32.totalorder %s1054, %s1051
                  %s1059 = sphi 0, %s1104
                  %s1060 = sphi %s946, %s1107
                  %s1061 = sphi %s957, %s1108
                $region85: #{fnet_forward.1} parent=81 // loop_header_branch
                  %1058 = sbr.rel (%p1055) target = $region89
                $region86: #{fnet_forward.1} parent=81 // loop_body
                  %v1062 = vld [vmem:[%s1060] sm:$0xff]
                  %1063 = vst [vmem:[%s1061] sm:$0xff] %v1062
                  %v1064 = vld [vmem:[%s1060 + $0x8] sm:$0xff]
                  %1065 = vst [vmem:[%s1061 + $0x8] sm:$0xff] %v1064
                  %v1066 = vld [vmem:[%s1060 + $0x10] sm:$0xff]
                  %1067 = vst [vmem:[%s1061 + $0x10] sm:$0xff] %v1066
                  %v1068 = vld [vmem:[%s1060 + $0x18] sm:$0xff]
                  %1069 = vst [vmem:[%s1061 + $0x18] sm:$0xff] %v1068
                  %v1070 = vld [vmem:[%s1060 + $0x20] sm:$0xff]
                  %1071 = vst [vmem:[%s1061 + $0x20] sm:$0xff] %v1070
                  %v1072 = vld [vmem:[%s1060 + $0x28] sm:$0xff]
                  %1073 = vst [vmem:[%s1061 + $0x28] sm:$0xff] %v1072
                  %v1074 = vld [vmem:[%s1060 + $0x30] sm:$0xff]
                  %1075 = vst [vmem:[%s1061 + $0x30] sm:$0xff] %v1074
                  %v1076 = vld [vmem:[%s1060 + $0x38] sm:$0xff]
                  %1077 = vst [vmem:[%s1061 + $0x38] sm:$0xff] %v1076
                  %v1078 = vld [vmem:[%s1060 + $0x40] sm:$0xff]
                  %1079 = vst [vmem:[%s1061 + $0x40] sm:$0xff] %v1078
                  %v1080 = vld [vmem:[%s1060 + $0x48] sm:$0xff]
                  %1081 = vst [vmem:[%s1061 + $0x48] sm:$0xff] %v1080
                  %v1082 = vld [vmem:[%s1060 + $0x50] sm:$0xff]
                  %1083 = vst [vmem:[%s1061 + $0x50] sm:$0xff] %v1082
                  %v1084 = vld [vmem:[%s1060 + $0x58] sm:$0xff]
                  %1085 = vst [vmem:[%s1061 + $0x58] sm:$0xff] %v1084
                  %v1086 = vld [vmem:[%s1060 + $0x60] sm:$0xff]
                  %1087 = vst [vmem:[%s1061 + $0x60] sm:$0xff] %v1086
                  %v1088 = vld [vmem:[%s1060 + $0x68] sm:$0xff]
                  %1089 = vst [vmem:[%s1061 + $0x68] sm:$0xff] %v1088
                  %v1090 = vld [vmem:[%s1060 + $0x70] sm:$0xff]
                  %1091 = vst [vmem:[%s1061 + $0x70] sm:$0xff] %v1090
                  %v1092 = vld [vmem:[%s1060 + $0x78] sm:$0xff]
                  %1093 = vst [vmem:[%s1061 + $0x78] sm:$0xff] %v1092
                  %v1094 = vld [vmem:[%s1060 + $0x80] sm:$0xff]
                  %1095 = vst [vmem:[%s1061 + $0x80] sm:$0xff] %v1094
                  %v1096 = vld [vmem:[%s1060 + $0x88] sm:$0xff]
                  %1097 = vst [vmem:[%s1061 + $0x88] sm:$0xff] %v1096
                  %v1098 = vld [vmem:[%s1060 + $0x90] sm:$0xff]
                  %1099 = vst [vmem:[%s1061 + $0x90] sm:$0xff] %v1098
                  %v1100 = vld [vmem:[%s1060 + $0x98] sm:$0xff]
                  %1101 = vst [vmem:[%s1061 + $0x98] sm:$0xff] %v1100
                  %s1102 = sadd.s32 1, %s1059
                  %p1103 = scmp.ge.s32.totalorder %s1102, %s1051
                  %s1104 = scalar_select %p1103, 0, %s1102
                  %s1105 = smul.u32 %s1104, 160
                  %s1106 = smul.u32 %s1104, 160
                  %s1107 = scalar_lea.vmem %s946, %s1105 [#allocation2]
                  %s1108 = scalar_lea.vmem %s957, %s1106
                $region87: #{fnet_forward.1} parent=81 // loop_footer
                  %s1056 = sadd.s32 %s1054, 1
                $region88: #{fnet_forward.1} parent=81 // loop_footer_branch
                  %1053 = sbr.rel target = $region84
                $region89: #{fnet_forward.1} parent=81 // loop_exit
                  _
                %s1109 = sdiv.u32.pop %s953, 20
                %s1110 = srem.u32.pop %s953, 20
                %s1111 = smul.u32 %s1109, 20
                %s1112 = smul.u32 8, %s1111
                %s1113 = scalar_lea.vmem %s946, %s1112 [#allocation2]
                %s1114 = smul.u32 8, %s1111
                %s1115 = scalar_lea.vmem %s957, %s1114
                // While loop
                $region90: #{fnet_forward.1} parent=81 // loop_pre_header
                  _
                $region91: #{fnet_forward.1} parent=81 // loop_header
                  %s1117 = sphi 0, %s1119
                  %p1118 = scmp.ge.s32.totalorder %s1117, %s1110
                  %s1122 = sphi 0, %s1129
                  %s1123 = sphi %s1113, %s1132
                  %s1124 = sphi %s1115, %s1133
                $region92: #{fnet_forward.1} parent=81 // loop_header_branch
                  %1121 = sbr.rel (%p1118) target = $region96
                $region93: #{fnet_forward.1} parent=81 // loop_body
                  %v1125 = vld [vmem:[%s1123] sm:$0xff]
                  %1126 = vst [vmem:[%s1124] sm:$0xff] %v1125
                  %s1127 = sadd.s32 1, %s1122
                  %p1128 = scmp.ge.s32.totalorder %s1127, %s1110
                  %s1129 = scalar_select %p1128, 0, %s1127
                  %s1130 = smul.u32 %s1129, 8
                  %s1131 = smul.u32 %s1129, 8
                  %s1132 = scalar_lea.vmem %s1113, %s1130 [#allocation2]
                  %s1133 = scalar_lea.vmem %s1115, %s1131
                $region94: #{fnet_forward.1} parent=81 // loop_footer
                  %s1119 = sadd.s32 %s1117, 1
                $region95: #{fnet_forward.1} parent=81 // loop_footer_branch
                  %1116 = sbr.rel target = $region91
                $region96: #{fnet_forward.1} parent=81 // loop_exit
                  _
              $region82: #{fnet_forward.1} parent=59 // pred_fallthru
                _
              // Predicated region
              $region97: #{fnet_forward.1} parent=59 // pred_check
                _
              $region98: #{fnet_forward.1} parent=59 // pred_check_branch
                %1135 = sbr.rel target = $region100
              $region99: #{fnet_forward.1} parent=59 // pred_region
                _
              $region100: #{fnet_forward.1} parent=59 // pred_fallthru
                _
            $region60: #{fnet_forward.1} parent=55 // pred_fallthru
              _
            // Predicated region
            $region61: #{fnet_forward.1} parent=55 // pred_check
              _
            $region62: #{fnet_forward.1} parent=55 // pred_check_branch
              %964 = sbr.rel target = $region64
            $region63: #{fnet_forward.1} parent=55 // pred_region
              %s966 = sdiv.u32.pop %s953, 20
              %s967 = srem.u32.pop %s953, 20
              // While loop
              $region65: #{fnet_forward.1} parent=63 // loop_pre_header
                _
              $region66: #{fnet_forward.1} parent=63 // loop_header
                %s969 = sphi 0, %s971
                %p970 = scmp.ge.s32.totalorder %s969, %s966
                %s974 = sphi 0, %s1019
                %s975 = sphi %s946, %s1022
                %s976 = sphi %s957, %s1023
              $region67: #{fnet_forward.1} parent=63 // loop_header_branch
                %973 = sbr.rel (%p970) target = $region71
              $region68: #{fnet_forward.1} parent=63 // loop_body
                %v977 = vld [vmem:[%s975] sm:$0xff]
                %978 = vst [vmem:[%s976] sm:$0xff] %v977
                %v979 = vld [vmem:[%s975 + $0x8] sm:$0xff]
                %980 = vst [vmem:[%s976 + $0x8] sm:$0xff] %v979
                %v981 = vld [vmem:[%s975 + $0x10] sm:$0xff]
                %982 = vst [vmem:[%s976 + $0x10] sm:$0xff] %v981
                %v983 = vld [vmem:[%s975 + $0x18] sm:$0xff]
                %984 = vst [vmem:[%s976 + $0x18] sm:$0xff] %v983
                %v985 = vld [vmem:[%s975 + $0x20] sm:$0xff]
                %986 = vst [vmem:[%s976 + $0x20] sm:$0xff] %v985
                %v987 = vld [vmem:[%s975 + $0x28] sm:$0xff]
                %988 = vst [vmem:[%s976 + $0x28] sm:$0xff] %v987
                %v989 = vld [vmem:[%s975 + $0x30] sm:$0xff]
                %990 = vst [vmem:[%s976 + $0x30] sm:$0xff] %v989
                %v991 = vld [vmem:[%s975 + $0x38] sm:$0xff]
                %992 = vst [vmem:[%s976 + $0x38] sm:$0xff] %v991
                %v993 = vld [vmem:[%s975 + $0x40] sm:$0xff]
                %994 = vst [vmem:[%s976 + $0x40] sm:$0xff] %v993
                %v995 = vld [vmem:[%s975 + $0x48] sm:$0xff]
                %996 = vst [vmem:[%s976 + $0x48] sm:$0xff] %v995
                %v997 = vld [vmem:[%s975 + $0x50] sm:$0xff]
                %998 = vst [vmem:[%s976 + $0x50] sm:$0xff] %v997
                %v999 = vld [vmem:[%s975 + $0x58] sm:$0xff]
                %1000 = vst [vmem:[%s976 + $0x58] sm:$0xff] %v999
                %v1001 = vld [vmem:[%s975 + $0x60] sm:$0xff]
                %1002 = vst [vmem:[%s976 + $0x60] sm:$0xff] %v1001
                %v1003 = vld [vmem:[%s975 + $0x68] sm:$0xff]
                %1004 = vst [vmem:[%s976 + $0x68] sm:$0xff] %v1003
                %v1005 = vld [vmem:[%s975 + $0x70] sm:$0xff]
                %1006 = vst [vmem:[%s976 + $0x70] sm:$0xff] %v1005
                %v1007 = vld [vmem:[%s975 + $0x78] sm:$0xff]
                %1008 = vst [vmem:[%s976 + $0x78] sm:$0xff] %v1007
                %v1009 = vld [vmem:[%s975 + $0x80] sm:$0xff]
                %1010 = vst [vmem:[%s976 + $0x80] sm:$0xff] %v1009
                %v1011 = vld [vmem:[%s975 + $0x88] sm:$0xff]
                %1012 = vst [vmem:[%s976 + $0x88] sm:$0xff] %v1011
                %v1013 = vld [vmem:[%s975 + $0x90] sm:$0xff]
                %1014 = vst [vmem:[%s976 + $0x90] sm:$0xff] %v1013
                %v1015 = vld [vmem:[%s975 + $0x98] sm:$0xff]
                %1016 = vst [vmem:[%s976 + $0x98] sm:$0xff] %v1015
                %s1017 = sadd.s32 1, %s974
                %p1018 = scmp.ge.s32.totalorder %s1017, %s966
                %s1019 = scalar_select %p1018, 0, %s1017
                %s1020 = smul.u32 %s1019, 160
                %s1021 = smul.u32 %s1019, 160
                %s1022 = scalar_lea.vmem %s946, %s1020 [#allocation2]
                %s1023 = scalar_lea.vmem %s957, %s1021
              $region69: #{fnet_forward.1} parent=63 // loop_footer
                %s971 = sadd.s32 %s969, 1
              $region70: #{fnet_forward.1} parent=63 // loop_footer_branch
                %968 = sbr.rel target = $region66
              $region71: #{fnet_forward.1} parent=63 // loop_exit
                _
              %s1024 = sdiv.u32.pop %s953, 20
              %s1025 = srem.u32.pop %s953, 20
              %s1026 = smul.u32 %s1024, 20
              %s1027 = smul.u32 8, %s1026
              %s1028 = scalar_lea.vmem %s946, %s1027 [#allocation2]
              %s1029 = smul.u32 8, %s1026
              %s1030 = scalar_lea.vmem %s957, %s1029
              // While loop
              $region72: #{fnet_forward.1} parent=63 // loop_pre_header
                _
              $region73: #{fnet_forward.1} parent=63 // loop_header
                %s1032 = sphi 0, %s1034
                %p1033 = scmp.ge.s32.totalorder %s1032, %s1025
                %s1037 = sphi 0, %s1044
                %s1038 = sphi %s1028, %s1047
                %s1039 = sphi %s1030, %s1048
              $region74: #{fnet_forward.1} parent=63 // loop_header_branch
                %1036 = sbr.rel (%p1033) target = $region78
              $region75: #{fnet_forward.1} parent=63 // loop_body
                %v1040 = vld [vmem:[%s1038] sm:$0xff]
                %1041 = vst [vmem:[%s1039] sm:$0xff] %v1040
                %s1042 = sadd.s32 1, %s1037
                %p1043 = scmp.ge.s32.totalorder %s1042, %s1025
                %s1044 = scalar_select %p1043, 0, %s1042
                %s1045 = smul.u32 %s1044, 8
                %s1046 = smul.u32 %s1044, 8
                %s1047 = scalar_lea.vmem %s1028, %s1045 [#allocation2]
                %s1048 = scalar_lea.vmem %s1030, %s1046
              $region76: #{fnet_forward.1} parent=63 // loop_footer
                %s1034 = sadd.s32 %s1032, 1
              $region77: #{fnet_forward.1} parent=63 // loop_footer_branch
                %1031 = sbr.rel target = $region73
              $region78: #{fnet_forward.1} parent=63 // loop_exit
                _
            $region64: #{fnet_forward.1} parent=55 // pred_fallthru
              _
          $region56: #{fnet_forward.1} parent=51 // pred_fallthru
            _
          %1136 = vnop
        $region52: #{fnet_forward.1} parent=47 // pred_fallthru
          _
      $region48: #{fnet_forward.1} parent=5 // pred_fallthru
        _
      %p1137 = scmp.le.s32.totalorder 2, %s13
      // Predicated region
      $region101: #{fnet_forward.1} parent=5 // pred_check
        %p1138 = pneg %p1137
      $region102: #{fnet_forward.1} parent=5 // pred_check_branch
        %1140 = sbr.rel (%p1138) target = $region104
      $region103: #{fnet_forward.1} parent=5 // pred_region
        %s1141 = ssub.s32 %s13, 2
        // Predicated region
        $region105: #{fnet_forward.1} parent=103 // pred_check
          %p1142 = pneg %p194
        $region106: #{fnet_forward.1} parent=103 // pred_check_branch
          %1144 = sbr.rel (%p1142) target = $region108
        $region107: #{fnet_forward.1} parent=103 // pred_region
          %s1145 = sand.u32 %s179, 1
          %s1146 = sand.u32 %s179, 1
          %s1147 = smul.addr %s1146, 160
          %s1148 = scalar_lea.vmem [#allocation2], %s1147
        $region108: #{fnet_forward.1} parent=103 // pred_fallthru
          _
      $region104: #{fnet_forward.1} parent=5 // pred_fallthru
        _
    $region6: #{fnet_forward.1} parent=1 // loop_footer
      %s17 = sadd.s32 1, %s13
    $region7: #{fnet_forward.1} parent=1 // loop_footer_branch
      %12 = sbr.rel target = $region3
    $region8: #{fnet_forward.1} parent=1 // loop_exit
      _

</llo_original>
